<compile_context>
chip_gen: v6e
topology: v6e:2x2x1
jax: 0.10.0
libtpu: 0.0.40
codegen_flags: <defaults>
</compile_context>

<pallas_src>
import jax
import jax.numpy as jnp
from jax.experimental import pallas as pl
from jax.experimental.pallas import tpu as pltpu

_LANES = 128


def _reweight_kernel(factor_ref, lj_ref, out_ref):
    # factor = sqrt(update / epsilon_old) - 1, precomputed in the wrapper and
    # read once per block from SMEM.  The multiply stays in the input dtype
    # (bf16 stays packed on v6e/v7x; Mosaic legalizes to f32 on v5e), so each
    # vreg costs a single VPU multiply - the kernel is purely HBM-DMA bound.
    x = lj_ref[...]
    out_ref[...] = (x * factor_ref[0].astype(x.dtype)).astype(out_ref.dtype)


def _sublane_multiple(dtype):
    # Minimum sublane tile per dtype packing: 8 (32-bit), 16 (16-bit), 32 (8-bit).
    return max(8, 32 // jnp.dtype(dtype).itemsize)


def deep_reweighting(lj, epsilon_old, update, *, tile_rows=2048,
                     min_pallas_elems=16384):
    """Pallas implementation of DeepReweighting.forward.

    lj:           any-shape array of LJ potentials (one per conformation)
    epsilon_old:  scalar
    update:       scalar learnable parameter (== nn.Parameter([initial_parameter]))
    tile_rows:    rows per (rows, 128) block.  2048 (1 MiB f32) suits v7x's
                  faster HBM while staying tiny vs. scoped VMEM on v5e/v6e.
    """
    orig_shape = lj.shape
    orig_dtype = lj.dtype
    n = lj.size

    # Hoisted scalar math (one tiny XLA op), later passed as an SMEM scalar.
    factor = (jnp.sqrt(jnp.asarray(update, jnp.float32).reshape(()) /
                       jnp.asarray(epsilon_old, jnp.float32).reshape(())) -
              jnp.float32(1.0))

    # Fallback path: tiny inputs (custom-call launch overhead dominates) and
    # inputs not divisible by 128 lanes (the Pallas path would need a full
    # jnp.pad pass + a full output-slice pass - 2-3x the traffic of the op
    # itself).  A fused XLA scalar multiply is a single optimal HBM pass.
    if n == 0 or n < max(int(min_pallas_elems), 1) or n % _LANES != 0:
        return (lj.astype(jnp.float32) * factor).astype(orig_dtype)

    rows = n // _LANES
    flat2d = lj.reshape(rows, _LANES)   # free bitcast: row-major trailing split

    sub = _sublane_multiple(orig_dtype)
    block_rows = (max(int(tile_rows), sub) // sub) * sub

    if rows <= sub:
        # Single full-extent block (full array dims are always a legal block
        # shape even if not a multiple of 8).  Only reachable with a lowered
        # min_pallas_elems.
        block_rows = rows
    elif rows <= block_rows:
        # Whole input would fit in one block: split into two grid steps so the
        # "parallel" axis can shard across both TensorCores on v7x.
        block_rows = pl.cdiv(pl.cdiv(rows, 2), sub) * sub

    # No rounding of `rows`: the ragged final block (if any) is read-padded /
    # write-masked by Pallas, so there is zero padding and zero post-slicing.
    grid = (pl.cdiv(rows, block_rows),)

    out2d = pl.pallas_call(
        _reweight_kernel,
        out_shape=jax.ShapeDtypeStruct((rows, _LANES), orig_dtype),
        grid=grid,
        in_specs=[
            pl.BlockSpec(memory_space=pltpu.MemorySpace.SMEM),      # factor scalar
            pl.BlockSpec((block_rows, _LANES), lambda i: (i, 0)),   # lj tile
        ],
        out_specs=pl.BlockSpec((block_rows, _LANES), lambda i: (i, 0)),
        compiler_params=pltpu.CompilerParams(
            # "parallel" lets the grid shard across both TensorCores on v7x;
            # no-op on single-core v5e/v6e.
            dimension_semantics=("parallel",)),
        cost_estimate=pl.CostEstimate(
            flops=n,
            transcendentals=0,
            bytes_accessed=2 * n * jnp.dtype(orig_dtype).itemsize),
    )(factor.reshape(1), flat2d)

    return out2d.reshape(orig_shape)    # free bitcast: collapse trailing dims


if __name__ == "__main__":
    key = jax.random.PRNGKey(0)

    epsilon_old = jnp.float32(0.25)
    initial_parameter = 0.5                   # DeepReweighting(initial_parameter)
    update = jnp.float32(initial_parameter)   # deterministic param init

    def reference(lj):
        # literal PyTorch forward: lj * sqrt(update / epsilon_old) - lj
        return lj * jnp.sqrt(update / epsilon_old) - lj

    # 1) Aligned 2-D batch of LJ energies -> Pallas path, 2 parallel grid
    #    steps (one per TensorCore on dual-core parts), no pad, no slice.
    lj_main = jax.random.normal(key, (256, 128), dtype=jnp.float32) * 10.0
    out_main = jax.block_until_ready(deep_reweighting(lj_main, epsilon_old, update))
    assert out_main.shape == lj_main.shape and out_main.dtype == lj_main.dtype
    assert jnp.allclose(out_main, reference(lj_main), rtol=1e-5, atol=1e-4)

    # 2) Multi-tile pipelined path with a ragged (masked) final block:
    #    rows=1000, block_rows=256 -> grid=4, last block has 232 valid rows.
    lj_grid = jax.random.normal(jax.random.PRNGKey(1), (1000, 128), dtype=jnp.float32) * 10.0
    out_grid = jax.block_until_ready(
        deep_reweighting(lj_grid, epsilon_old, update, tile_rows=256))
    assert out_grid.shape == lj_grid.shape
    assert jnp.allclose(out_grid, reference(lj_grid), rtol=1e-5, atol=1e-4)

    # 3) Row count not a multiple of 8 -> masked sublane boundary on the
    #    final block (rows=250, block_rows=128, grid=2).
    lj_odd = jax.random.normal(jax.random.PRNGKey(2), (250, 128), dtype=jnp.float32)
    out_odd = jax.block_until_ready(deep_reweighting(lj_odd, epsilon_old, update))
    assert jnp.allclose(out_odd, reference(lj_odd), rtol=1e-5, atol=1e-4)

    # 4) Small / non-128-aligned input -> fused single-pass XLA fallback
    #    (no pad, no slice), identical forward semantics.
    lj_small = jax.random.normal(jax.random.PRNGKey(3), (1000,), dtype=jnp.float32) * 10.0
    out_small = jax.block_until_ready(deep_reweighting(lj_small, epsilon_old, update))
    assert out_small.shape == lj_small.shape
    assert jnp.allclose(out_small, reference(lj_small), rtol=1e-5, atol=1e-4)

    print("KERNEL_OK")
</pallas_src>

<mosaic_0001>
module attributes {stable_mosaic.version = 11 : i64} {
  func.func @_reweight_kernel(%arg0: i32, %arg1: memref<1xf32, #tpu.memory_space<smem>>, %arg2: memref<128x128xf32, #tpu.memory_space<vmem>>, %arg3: memref<128x128xf32, #tpu.memory_space<vmem>>) attributes {dimension_semantics = [#tpu.dimension_semantics<parallel>], iteration_bounds = array<i64: 2>, scalar_prefetch = 0 : i64, scratch_operands = 0 : i64, tpu.core_type = #tpu.core_type<tc>, window_params = [{transform_indices = @transform_0, window_bounds = array<i64: 1>}, {transform_indices = @transform_1, window_bounds = array<i64: 128, 128>}, {transform_indices = @transform_2, window_bounds = array<i64: 128, 128>}]} {
    %c0 = arith.constant 0 : index
    %c0_0 = arith.constant 0 : index
    %0 = vector.load %arg2[%c0, %c0_0] : memref<128x128xf32, #tpu.memory_space<vmem>>, vector<128x128xf32>
    %c0_1 = arith.constant 0 : index
    %1 = memref.load %arg1[%c0_1] : memref<1xf32, #tpu.memory_space<smem>>
    %2 = vector.broadcast %1 : f32 to vector<128x128xf32>
    %3 = arith.mulf %0, %2 : vector<128x128xf32>
    %c0_2 = arith.constant 0 : index
    %c0_3 = arith.constant 0 : index
    %4 = vector.load %arg3[%c0_2, %c0_3] : memref<128x128xf32, #tpu.memory_space<vmem>>, vector<128x128xf32>
    tpu.vector_store %arg3[%c0_2, %c0_3], %3 {strides = array<i32>} : memref<128x128xf32, #tpu.memory_space<vmem>>, vector<128x128xf32>,
    return
  }
  func.func @transform_0(%arg0: i32) -> i32 {
    %c0_i32 = arith.constant 0 : i32
    %c0_i32_0 = arith.constant 0 : i32
    return %c0_i32 : i32
  }
  func.func @transform_1(%arg0: i32) -> (i32, i32) {
    %c0_i32 = arith.constant 0 : i32
    %c0_i32_0 = arith.constant 0 : i32
    return %arg0, %c0_i32 : i32, i32
  }
  func.func @transform_2(%arg0: i32) -> (i32, i32) {
    %c0_i32 = arith.constant 0 : i32
    %c0_i32_0 = arith.constant 0 : i32
    return %arg0, %c0_i32 : i32, i32
  }
}

</mosaic_0001>

<llo_original>
// kernel: tpu_custom_call.1
$region0: #{tpu_custom_call.1}
  #allocation0 [shape = 'u32[]', space=smem, size = 0x4, offset = 0x4, fixed_abs, tag = 'smem constant byte address 0x4 - core index']
  #allocation1 [shape = 'u32[144,128]{1,0:T(1,128)}', space=vmem, size = 0x12000, scoped, tag = 'internal scratch']
  #allocation2 [shape = 'f32[1]{0:T(128)S(6)}', space=smem, size = 0x200, scoped, tag = 'scoped memory for tpu_custom_call.1']
  %s0 = inlined_call_operand.<no memory space> [shape: f32[1], index: 0, kind: input, shape index: {}]
  %s1 = inlined_call_operand.hbm [shape: f32[256,128], index: 1, kind: input, shape index: {}]
  %s2 = inlined_call_operand.hbm [shape: f32[256,128], index: 2, kind: output, shape index: {}]
  %s3 = sld [smem:[#allocation0]]
  $region45: #{tpu_custom_call.1} parent=0
    _
  %s5 = ssub.s32 1, %s3
  %s6 = scalar_select 0, %s5, %s3
  %7 = sst [smem:[#allocation2]] %s0
  $region1: #{tpu_custom_call.1} parent=0
    #allocation3 [shape = 'u8[131072]{0}', space=vmem, size = 0x20000, scoped, tag = 'input window, operand 1']
    #allocation4 [shape = 's32[2]{0}', space=sflag, size = 0x8, scoped, tag = 'scoped memory for tpu_custom_call.1']
    #allocation5 [shape = 's32[2]{0}', space=sflag, size = 0x8, scoped, tag = 'scoped memory for tpu_custom_call.1']
    #allocation6 [shape = 'u8[131072]{0}', space=vmem, size = 0x20000, scoped, tag = 'output window, operand 0']
    %8 = vsyncpa [#allocation4], 0
    %s9 = scalar_lea.sflag [#allocation4], 1
    %10 = vsyncpa %s9, 0
    %11 = vsyncpa [#allocation5], 0
    %s12 = scalar_lea.sflag [#allocation5], 1
    %13 = vsyncpa %s12, 0
    loop: start=0, step=1, limit=4
    $region2: #{tpu_custom_call.1} parent=1 // loop_pre_header
      _
    $region3: #{tpu_custom_call.1} parent=1 // loop_header
      %s15 = sphi 0, %s19
      %p16 = scmp.ge.s32.totalorder %s15, 4
      %s23 = sphi 0, %s23
      %s25 = sphi 0, %s23
      %s26 = sphi 0, %s25
      %s40 = sphi 0, %s26
      %s46 = sphi 0, %s48
      %s49 = sphi 0, %s46
      %s50 = sphi 0, %s49
      %s66 = sphi 0, %s50
      %s72 = sphi 0, %s74
      %s75 = sphi 0, %s72
      %s76 = sphi 0, %s75
      %s92 = sphi 0, %s76
    $region4: #{tpu_custom_call.1} parent=1 // loop_header_branch
      %18 = sbr.rel (%p16) target = $region8
    $region5: #{tpu_custom_call.1} parent=1 // loop_body
      %s20 = ssub.s32 %s15, 1
      %s21 = ssub.s32 %s15, 2
      %s22 = sadd.s32 %s15, 1
      %s24 = sadd.s32 %s23, 1
      %p27 = scmp.eq.s32.totalorder %s15, 1
      %p28 = scmp.ne.s32.totalorder %s23, %s25
      %p29 = scmp.eq.s32.totalorder %s15, 0
      %p30 = por %p28, %p29
      %p31 = scmp.ne.s32.totalorder %s23, %s25
      %p32 = scmp.eq.s32.totalorder %s20, 1
      %p33 = por %p31, %p32
      %p34 = scmp.ne.s32.totalorder %s25, %s26
      %p35 = scmp.eq.s32.totalorder %s20, 0
      %p36 = por %p34, %p35
      %p37 = scmp.ne.s32.totalorder %s25, %s26
      %p38 = scmp.eq.s32.totalorder %s21, 1
      %p39 = por %p37, %p38
      %p41 = scmp.ne.s32.totalorder %s26, %s40
      %p42 = scmp.eq.s32.totalorder %s21, 0
      %p43 = por %p41, %p42
      %s44 = ssub.s32 %s15, %s22
      %p45 = scmp.eq.s32.totalorder %s44, 0
      %s47 = sadd.s32 %s46, 1
      %s48 = scalar_select %p45, %s46, %s47
      %p51 = pneg %p45
      %p52 = scmp.eq.s32.totalorder %s15, 1
      %p53 = por %p51, %p52
      %p54 = scmp.ne.s32.totalorder %s46, %s49
      %p55 = scmp.eq.s32.totalorder %s15, 0
      %p56 = por %p54, %p55
      %p57 = scmp.ne.s32.totalorder %s46, %s49
      %p58 = scmp.eq.s32.totalorder %s20, 1
      %p59 = por %p57, %p58
      %p60 = scmp.ne.s32.totalorder %s49, %s50
      %p61 = scmp.eq.s32.totalorder %s20, 0
      %p62 = por %p60, %p61
      %p63 = scmp.ne.s32.totalorder %s49, %s50
      %p64 = scmp.eq.s32.totalorder %s21, 1
      %p65 = por %p63, %p64
      %p67 = scmp.ne.s32.totalorder %s50, %s66
      %p68 = scmp.eq.s32.totalorder %s21, 0
      %p69 = por %p67, %p68
      %s70 = ssub.s32 %s15, %s22
      %p71 = scmp.eq.s32.totalorder %s70, 0
      %s73 = sadd.s32 %s72, 1
      %s74 = scalar_select %p71, %s72, %s73
      %p77 = pneg %p71
      %p78 = scmp.eq.s32.totalorder %s15, 1
      %p79 = por %p77, %p78
      %p80 = scmp.ne.s32.totalorder %s72, %s75
      %p81 = scmp.eq.s32.totalorder %s15, 0
      %p82 = por %p80, %p81
      %p83 = scmp.ne.s32.totalorder %s72, %s75
      %p84 = scmp.eq.s32.totalorder %s20, 1
      %p85 = por %p83, %p84
      %p86 = scmp.ne.s32.totalorder %s75, %s76
      %p87 = scmp.eq.s32.totalorder %s20, 0
      %p88 = por %p86, %p87
      %p89 = scmp.ne.s32.totalorder %s75, %s76
      %p90 = scmp.eq.s32.totalorder %s21, 1
      %p91 = por %p89, %p90
      %p93 = scmp.ne.s32.totalorder %s76, %s92
      %p94 = scmp.eq.s32.totalorder %s21, 0
      %p95 = por %p93, %p94
      %p96 = scmp.le.s32.totalorder 1, %s15
      %p97 = scmp.lt.s32.totalorder %s15, 3
      %p98 = pnand %p96, %p97
      %p99 = pneg %p98
      // Predicated region
      $region9: #{tpu_custom_call.1} parent=5 // pred_check
        _
      $region10: #{tpu_custom_call.1} parent=5 // pred_check_branch
        %101 = sbr.rel (%p98) target = $region12
      $region11: #{tpu_custom_call.1} parent=5 // pred_region
        %s102 = ssub.s32 %s15, 1
        // Predicated region
        $region13: #{tpu_custom_call.1} parent=11 // pred_check
          %p103 = pneg %p36
        $region14: #{tpu_custom_call.1} parent=11 // pred_check_branch
          %105 = sbr.rel (%p103) target = $region16
        $region15: #{tpu_custom_call.1} parent=11 // pred_region
          _
        $region16: #{tpu_custom_call.1} parent=11 // pred_fallthru
          _
      $region12: #{tpu_custom_call.1} parent=5 // pred_fallthru
        _
      %p106 = scmp.lt.s32.totalorder %s15, 2
      // Predicated region
      $region17: #{tpu_custom_call.1} parent=5 // pred_check
        %p107 = pneg %p106
      $region18: #{tpu_custom_call.1} parent=5 // pred_check_branch
        %109 = sbr.rel (%p107) target = $region20
      $region19: #{tpu_custom_call.1} parent=5 // pred_region
        // Predicated region
        $region21: #{tpu_custom_call.1} parent=19 // pred_check
          %p110 = pneg %p56
        $region22: #{tpu_custom_call.1} parent=19 // pred_check_branch
          %112 = sbr.rel (%p110) target = $region24
        $region23: #{tpu_custom_call.1} parent=19 // pred_region
          %s113 = sand.u32 %s46, 1
          %s114 = scalar_lea.sflag [#allocation4], %s113
          %s115 = sand.u32 %s46, 1
          %s116 = smul.addr %s115, 128
          %s117 = scalar_lea.vmem [#allocation3], %s116
          %s118 = smul.u32 16, %s15
          %s120 = ssub.s32 2048, 2048
          %121 = vsyncadd %s114, %s120
          %s122 = smul.addr %s118, 128
          %s123 = scalar_lea.hbm %s1, %s122
          %s124 = sshll.u32 %s117, 4
          %s125 = int_to_ptr.vmem [resolvable:$true] %s124
          %130 = dma.hbm_to_vmem [thread:$0]  %s123, 2048, %s125, %s114, 128, 128, 8
        $region24: #{tpu_custom_call.1} parent=19 // pred_fallthru
          _
      $region20: #{tpu_custom_call.1} parent=5 // pred_fallthru
        _
      %p131 = scmp.le.s32.totalorder 1, %s15
      %p132 = scmp.lt.s32.totalorder %s15, 3
      %p133 = pnand %p131, %p132
      %p134 = pneg %p133
      // Predicated region
      $region25: #{tpu_custom_call.1} parent=5 // pred_check
        _
      $region26: #{tpu_custom_call.1} parent=5 // pred_check_branch
        %136 = sbr.rel (%p133) target = $region28
      $region27: #{tpu_custom_call.1} parent=5 // pred_region
        %s137 = ssub.s32 %s15, 1
        %s138 = sand.u32 %s49, 1
        %s139 = scalar_lea.sflag [#allocation4], %s138
        %s140 = sand.u32 %s49, 1
        %s141 = smul.addr %s140, 128
        %s142 = scalar_lea.vmem [#allocation3], %s141
        // Predicated region
        $region29: #{tpu_custom_call.1} parent=27 // pred_check
          %p143 = pneg %p62
        $region30: #{tpu_custom_call.1} parent=27 // pred_check_branch
          %145 = sbr.rel (%p143) target = $region32
        $region31: #{tpu_custom_call.1} parent=27 // pred_region
          %146 = dma.done %s139, 2048
        $region32: #{tpu_custom_call.1} parent=27 // pred_fallthru
          _
        %p147 = pneg %p36
        %p148 = pneg %p33
        %s149 = sand.u32 %s49, 1
        %s150 = scalar_lea.sflag [#allocation4], %s149
        %s151 = sand.u32 %s49, 1
        %s152 = smul.addr %s151, 128
        %s153 = scalar_lea.vmem [#allocation3], %s152
        %p154 = pneg %p62
        %p155 = pneg %p59
        %p156 = pneg %p88
        %p157 = pneg %p85
        %s158 = sand.u32 %s75, 1
        %s159 = scalar_lea.sflag [#allocation5], %s158
        %s160 = sand.u32 %s75, 1
        %s161 = smul.addr %s160, 128
        %s162 = scalar_lea.vmem [#allocation6], %s161
        %s163 = smul.u32 16, %s20
        %s164 = smul.u32 16, %s20
        %v165 = vld [vmem:[%s142] sm:$0xff]
        %v166 = vld [vmem:[%s142 + $0x8] sm:$0xff]
        %v167 = vld [vmem:[%s142 + $0x10] sm:$0xff]
        %v168 = vld [vmem:[%s142 + $0x18] sm:$0xff]
        %v169 = vld [vmem:[%s142 + $0x20] sm:$0xff]
        %v170 = vld [vmem:[%s142 + $0x28] sm:$0xff]
        %v171 = vld [vmem:[%s142 + $0x30] sm:$0xff]
        %v172 = vld [vmem:[%s142 + $0x38] sm:$0xff]
        %v173 = vld [vmem:[%s142 + $0x40] sm:$0xff]
        %v174 = vld [vmem:[%s142 + $0x48] sm:$0xff]
        %v175 = vld [vmem:[%s142 + $0x50] sm:$0xff]
        %v176 = vld [vmem:[%s142 + $0x58] sm:$0xff]
        %v177 = vld [vmem:[%s142 + $0x60] sm:$0xff]
        %v178 = vld [vmem:[%s142 + $0x68] sm:$0xff]
        %v179 = vld [vmem:[%s142 + $0x70] sm:$0xff]
        %v180 = vld [vmem:[%s142 + $0x78] sm:$0xff]
        %s181 = sld [smem:[#allocation2]]
        %v182 = vstv %s181
        %v183 = vmul.f32 %v165, %v182
        %v184 = vmul.f32 %v166, %v182
        %v185 = vmul.f32 %v167, %v182
        %v186 = vmul.f32 %v168, %v182
        %v187 = vmul.f32 %v169, %v182
        %v188 = vmul.f32 %v170, %v182
        %v189 = vmul.f32 %v171, %v182
        %v190 = vmul.f32 %v172, %v182
        %v191 = vmul.f32 %v173, %v182
        %v192 = vmul.f32 %v174, %v182
        %v193 = vmul.f32 %v175, %v182
        %v194 = vmul.f32 %v176, %v182
        %v195 = vmul.f32 %v177, %v182
        %v196 = vmul.f32 %v178, %v182
        %v197 = vmul.f32 %v179, %v182
        %v198 = vmul.f32 %v180, %v182
        %199 = vst [vmem:[%s162] sm:$0xff] %v183
        %200 = vst [vmem:[%s162 + $0x8] sm:$0xff] %v184
        %201 = vst [vmem:[%s162 + $0x10] sm:$0xff] %v185
        %202 = vst [vmem:[%s162 + $0x18] sm:$0xff] %v186
        %203 = vst [vmem:[%s162 + $0x20] sm:$0xff] %v187
        %204 = vst [vmem:[%s162 + $0x28] sm:$0xff] %v188
        %205 = vst [vmem:[%s162 + $0x30] sm:$0xff] %v189
        %206 = vst [vmem:[%s162 + $0x38] sm:$0xff] %v190
        %207 = vst [vmem:[%s162 + $0x40] sm:$0xff] %v191
        %208 = vst [vmem:[%s162 + $0x48] sm:$0xff] %v192
        %209 = vst [vmem:[%s162 + $0x50] sm:$0xff] %v193
        %210 = vst [vmem:[%s162 + $0x58] sm:$0xff] %v194
        %211 = vst [vmem:[%s162 + $0x60] sm:$0xff] %v195
        %212 = vst [vmem:[%s162 + $0x68] sm:$0xff] %v196
        %213 = vst [vmem:[%s162 + $0x70] sm:$0xff] %v197
        %214 = vst [vmem:[%s162 + $0x78] sm:$0xff] %v198
        %s215 = sand.u32 %s75, 1
        %s216 = scalar_lea.sflag [#allocation5], %s215
        %s217 = sand.u32 %s75, 1
        %s218 = smul.addr %s217, 128
        %s219 = scalar_lea.vmem [#allocation6], %s218
        // Predicated region
        $region33: #{tpu_custom_call.1} parent=27 // pred_check
          %p220 = pneg %p85
        $region34: #{tpu_custom_call.1} parent=27 // pred_check_branch
          %222 = sbr.rel (%p220) target = $region36
        $region35: #{tpu_custom_call.1} parent=27 // pred_region
          %s223 = smul.u32 16, %s20
          %s225 = ssub.s32 2048, 2048
          %226 = vsyncadd %s216, %s225
          %s227 = smul.addr %s223, 128
          %s228 = scalar_lea.hbm %s2, %s227
          %s229 = sshll.u32 %s219, 4
          %s230 = int_to_ptr.vmem [resolvable:$true] %s229
          %235 = dma.vmem_to_hbm [thread:$0]  %s230, 2048, %s228, %s216, 128, 128, 8
        $region36: #{tpu_custom_call.1} parent=27 // pred_fallthru
          _
      $region28: #{tpu_custom_call.1} parent=5 // pred_fallthru
        _
      %p236 = scmp.le.s32.totalorder 2, %s15
      // Predicated region
      $region37: #{tpu_custom_call.1} parent=5 // pred_check
        %p237 = pneg %p236
      $region38: #{tpu_custom_call.1} parent=5 // pred_check_branch
        %239 = sbr.rel (%p237) target = $region40
      $region39: #{tpu_custom_call.1} parent=5 // pred_region
        %s240 = ssub.s32 %s15, 2
        // Predicated region
        $region41: #{tpu_custom_call.1} parent=39 // pred_check
          %p241 = pneg %p91
        $region42: #{tpu_custom_call.1} parent=39 // pred_check_branch
          %243 = sbr.rel (%p241) target = $region44
        $region43: #{tpu_custom_call.1} parent=39 // pred_region
          %s244 = sand.u32 %s76, 1
          %s245 = scalar_lea.sflag [#allocation5], %s244
          %s246 = sand.u32 %s76, 1
          %s247 = smul.addr %s246, 128
          %s248 = scalar_lea.vmem [#allocation6], %s247
          %249 = dma.done %s245, 2048
        $region44: #{tpu_custom_call.1} parent=39 // pred_fallthru
          _
      $region40: #{tpu_custom_call.1} parent=5 // pred_fallthru
        _
    $region6: #{tpu_custom_call.1} parent=1 // loop_footer
      %s19 = sadd.s32 1, %s15
    $region7: #{tpu_custom_call.1} parent=1 // loop_footer_branch
      %14 = sbr.rel target = $region3
    $region8: #{tpu_custom_call.1} parent=1 // loop_exit
      _
    %250 = vsyncpa [#allocation4], 1
    %s251 = scalar_lea.sflag [#allocation4], 1
    %252 = vsyncpa %s251, 1
    %253 = vsyncpa [#allocation5], 1
    %s254 = scalar_lea.sflag [#allocation5], 1
    %255 = vsyncpa %s254, 1

</llo_original>
